<compile_context>
chip_gen: v7x
topology: tpu7x:2x2x1
jax: 0.10.0
libtpu: 0.0.40
codegen_flags: <defaults>
</compile_context>

<pallas_src>
import jax
import jax.numpy as jnp
from jax import lax
from jax.experimental import pallas as pl
from jax.experimental.pallas import tpu as pltpu


def _cosine_gather_kernel(uid_ref, iid_ref, u_hbm, i_hbm, o_ref,
                          ubuf, vbuf, sem):
    # uid_ref, iid_ref : (B_pad,)       int32 ids, scalar-prefetched into SMEM
    # u_hbm            : (n_users, D)   f32 user table, left in HBM (pl.ANY)
    # i_hbm            : (n_items, D)   f32 item table, left in HBM (pl.ANY)
    # o_ref            : (1, TB)        f32 lane-dense output block
    # ubuf, vbuf       : (TB, D)        f32 VMEM scratch for gathered rows
    # sem              : (2,)           DMA semaphores (user rows, item rows)
    t = pl.program_id(0)
    tb, d = ubuf.shape
    base = t * tb

    # --- id-indexed row gather: one small DMA per (user, item) row ----------
    @pl.loop(0, tb)
    def _(r):
        uid = uid_ref[base + r]
        iid = iid_ref[base + r]
        pltpu.make_async_copy(u_hbm.at[uid], ubuf.at[r], sem.at[0]).start()
        pltpu.make_async_copy(i_hbm.at[iid], vbuf.at[r], sem.at[1]).start()

    # Wait for all 2*TB row copies (each wait consumes one row's byte count;
    # src index in the wait descriptor is irrelevant, only the shape matters).
    @pl.loop(0, tb)
    def _(r):
        pltpu.make_async_copy(u_hbm.at[0], ubuf.at[r], sem.at[0]).wait()
        pltpu.make_async_copy(i_hbm.at[0], vbuf.at[r], sem.at[1]).wait()

    # --- cosine similarity, batch on the leading axis ------------------------
    u = ubuf[...]                               # (TB, D) f32
    v = vbuf[...]
    uv = jnp.sum(u * v, axis=1)                 # (TB,)
    uu = jnp.sum(u * u, axis=1)
    vv = jnp.sum(v * v, axis=1)

    eps2 = jnp.float32(1e-8) * jnp.float32(1e-8)
    # uv * rsqrt(max(uu,eps^2)*max(vv,eps^2)) == uv / (max(|u|,eps)*max(|v|,eps))
    cos = uv * lax.rsqrt(jnp.maximum(uu, eps2) * jnp.maximum(vv, eps2))
    o_ref[...] = cos.reshape(1, tb)             # lane-dense store


def recommender_forward(user_emb_table, item_emb_table, user_id, item_id,
                        *, tb=128):
    """Pallas implementation of RecommenderNN.forward -> (B,) float32."""
    B = user_id.shape[0]
    n_users, D = user_emb_table.shape
    n_items, D2 = item_emb_table.shape
    assert D == D2

    # Pad the batch to a multiple of TB (pad ids with row 0, slice back later).
    num_tiles = pl.cdiv(B, tb)
    b_pad = num_tiles * tb
    uid = jnp.zeros((b_pad,), jnp.int32).at[:B].set(user_id.astype(jnp.int32))
    iid = jnp.zeros((b_pad,), jnp.int32).at[:B].set(item_id.astype(jnp.int32))

    ut = user_emb_table.astype(jnp.float32)     # natural (vocab, D) row layout
    it = item_emb_table.astype(jnp.float32)

    cost = pl.CostEstimate(
        flops=(6 * D + 6) * b_pad,
        transcendentals=b_pad,
        bytes_accessed=(2 * D * 4 + 2 * 4 + 4) * b_pad,
    )

    grid_spec = pltpu.PrefetchScalarGridSpec(
        num_scalar_prefetch=2,                  # uid, iid -> SMEM
        grid=(num_tiles,),
        in_specs=[
            pl.BlockSpec(memory_space=pl.ANY),  # user table stays in HBM
            pl.BlockSpec(memory_space=pl.ANY),  # item table stays in HBM
        ],
        out_specs=pl.BlockSpec((1, tb), lambda t, uid, iid: (t, 0)),
        scratch_shapes=[
            pltpu.VMEM((tb, D), jnp.float32),   # gathered user rows
            pltpu.VMEM((tb, D), jnp.float32),   # gathered item rows
            pltpu.SemaphoreType.DMA((2,)),
        ],
    )

    out = pl.pallas_call(
        _cosine_gather_kernel,
        out_shape=jax.ShapeDtypeStruct((num_tiles, tb), jnp.float32),
        grid_spec=grid_spec,
        compiler_params=pltpu.CompilerParams(
            dimension_semantics=("parallel",),
        ),
        cost_estimate=cost,
    )(uid, iid, ut, it)

    return out.reshape(b_pad)[:B]


def _reference(user_emb_table, item_emb_table, user_id, item_id):
    u = user_emb_table[user_id]
    v = item_emb_table[item_id]
    dot = jnp.sum(u * v, axis=-1)
    un = jnp.maximum(jnp.linalg.norm(u, axis=-1), 1e-8)
    vn = jnp.maximum(jnp.linalg.norm(v, axis=-1), 1e-8)
    return dot / (un * vn)


if __name__ == "__main__":
    # Small, deterministic setup consistent with the module's __init__.
    n_users, n_items, embedding_dim = 16, 24, 32
    batch = 8

    key = jax.random.PRNGKey(0)
    k_u, k_i, k_uid, k_iid = jax.random.split(key, 4)

    # nn.Embedding default init ~ N(0, 1)
    user_emb_table = jax.random.normal(k_u, (n_users, embedding_dim), jnp.float32)
    item_emb_table = jax.random.normal(k_i, (n_items, embedding_dim), jnp.float32)

    user_id = jax.random.randint(k_uid, (batch,), 0, n_users, dtype=jnp.int32)
    item_id = jax.random.randint(k_iid, (batch,), 0, n_items, dtype=jnp.int32)

    out = recommender_forward(user_emb_table, item_emb_table, user_id, item_id)
    out = jax.block_until_ready(out)

    ref = _reference(user_emb_table, item_emb_table, user_id, item_id)
    assert out.shape == (batch,)
    assert jnp.allclose(out, ref, atol=1e-5, rtol=1e-5), (out, ref)

    print("KERNEL_OK")
</pallas_src>

<mosaic_0001>
module attributes {stable_mosaic.version = 11 : i64} {
  func.func @_cosine_gather_kernel(%arg0: i32, %arg1: memref<128xi32, #tpu.memory_space<smem>>, %arg2: memref<128xi32, #tpu.memory_space<smem>>, %arg3: memref<16x32xf32, #tpu.memory_space<any>>, %arg4: memref<24x32xf32, #tpu.memory_space<any>>, %arg5: memref<1x128xf32, #tpu.memory_space<vmem>>, %arg6: memref<128x32xf32, #tpu.memory_space<vmem>>, %arg7: memref<128x32xf32, #tpu.memory_space<vmem>>, %arg8: memref<2x!tpu.dma_semaphore, #tpu.memory_space<semaphore_mem>>) attributes {dimension_semantics = [#tpu.dimension_semantics<parallel>], iteration_bounds = array<i64: 1>, scalar_prefetch = 2 : i64, scratch_operands = 3 : i64, tpu.core_type = #tpu.core_type<tc>, window_params = [{}, {}, {transform_indices = @transform_2, window_bounds = array<i64: 1, 128>}]} {
    %c128_i32 = arith.constant 128 : i32
    %0 = arith.muli %arg0, %c128_i32 : i32
    %c0_i32 = arith.constant 0 : i32
    %c128_i32_0 = arith.constant 128 : i32
    %1 = arith.addi %c0_i32, %c128_i32_0 : i32
    %c1_i32 = arith.constant 1 : i32
    scf.for %arg9 = %c0_i32 to %1 step %c1_i32  : i32 {
      %c1_i32_15 = arith.constant 1 : i32
      %21 = arith.muli %arg9, %c1_i32_15 : i32
      %c0_i32_16 = arith.constant 0 : i32
      %22 = arith.addi %c0_i32_16, %21 : i32
      %23 = arith.addi %0, %22 : i32
      %24 = arith.index_cast %23 : i32 to index
      %25 = memref.load %arg1[%24] : memref<128xi32, #tpu.memory_space<smem>>
      %26 = arith.addi %0, %22 : i32
      %27 = arith.index_cast %26 : i32 to index
      %28 = memref.load %arg2[%27] : memref<128xi32, #tpu.memory_space<smem>>
      %c0_i32_17 = arith.constant 0 : i32
      %c0_i32_18 = arith.constant 0 : i32
      %29 = tpu.memref_slice %arg3[%25, %c0_i32_18] : memref<16x32xf32, #tpu.memory_space<any>> -> memref<1x32xf32, #tpu.memory_space<any>>
      %30 = tpu.memref_squeeze %29 : memref<1x32xf32, #tpu.memory_space<any>> -> memref<32xf32, #tpu.memory_space<any>>
      %c0_i32_19 = arith.constant 0 : i32
      %31 = tpu.memref_slice %arg6[%22, %c0_i32_19] : memref<128x32xf32, #tpu.memory_space<vmem>> -> memref<1x32xf32, #tpu.memory_space<vmem>>
      %32 = tpu.memref_squeeze %31 : memref<1x32xf32, #tpu.memory_space<vmem>> -> memref<32xf32, #tpu.memory_space<vmem>>
      %33 = tpu.memref_slice %arg8[%c0_i32_17] : memref<2x!tpu.dma_semaphore, #tpu.memory_space<semaphore_mem>> -> memref<1x!tpu.dma_semaphore, #tpu.memory_space<semaphore_mem>>
      %34 = tpu.memref_squeeze %33 : memref<1x!tpu.dma_semaphore, #tpu.memory_space<semaphore_mem>> -> memref<!tpu.dma_semaphore, #tpu.memory_space<semaphore_mem>>
      tpu.enqueue_dma source(%30 : memref<32xf32, #tpu.memory_space<any>>) target(%32 : memref<32xf32, #tpu.memory_space<vmem>>) target_semaphore(%34 : memref<!tpu.dma_semaphore, #tpu.memory_space<semaphore_mem>>)
      %c1_i32_20 = arith.constant 1 : i32
      %c0_i32_21 = arith.constant 0 : i32
      %35 = tpu.memref_slice %arg4[%28, %c0_i32_21] : memref<24x32xf32, #tpu.memory_space<any>> -> memref<1x32xf32, #tpu.memory_space<any>>
      %36 = tpu.memref_squeeze %35 : memref<1x32xf32, #tpu.memory_space<any>> -> memref<32xf32, #tpu.memory_space<any>>
      %c0_i32_22 = arith.constant 0 : i32
      %37 = tpu.memref_slice %arg7[%22, %c0_i32_22] : memref<128x32xf32, #tpu.memory_space<vmem>> -> memref<1x32xf32, #tpu.memory_space<vmem>>
      %38 = tpu.memref_squeeze %37 : memref<1x32xf32, #tpu.memory_space<vmem>> -> memref<32xf32, #tpu.memory_space<vmem>>
      %39 = tpu.memref_slice %arg8[%c1_i32_20] : memref<2x!tpu.dma_semaphore, #tpu.memory_space<semaphore_mem>> -> memref<1x!tpu.dma_semaphore, #tpu.memory_space<semaphore_mem>>
      %40 = tpu.memref_squeeze %39 : memref<1x!tpu.dma_semaphore, #tpu.memory_space<semaphore_mem>> -> memref<!tpu.dma_semaphore, #tpu.memory_space<semaphore_mem>>
      tpu.enqueue_dma source(%36 : memref<32xf32, #tpu.memory_space<any>>) target(%38 : memref<32xf32, #tpu.memory_space<vmem>>) target_semaphore(%40 : memref<!tpu.dma_semaphore, #tpu.memory_space<semaphore_mem>>)
    }
    %c128_i32_1 = arith.constant 128 : i32
    %c0_i32_2 = arith.constant 0 : i32
    %c128_i32_3 = arith.constant 128 : i32
    %2 = arith.addi %c0_i32_2, %c128_i32_3 : i32
    %c1_i32_4 = arith.constant 1 : i32
    scf.for %arg9 = %c0_i32_2 to %2 step %c1_i32_4  : i32 {
      %c1_i32_15 = arith.constant 1 : i32
      %21 = arith.muli %arg9, %c1_i32_15 : i32
      %c0_i32_16 = arith.constant 0 : i32
      %22 = arith.addi %c0_i32_16, %21 : i32
      %c0_i32_17 = arith.constant 0 : i32
      %c0_i32_18 = arith.constant 0 : i32
      %c0_i32_19 = arith.constant 0 : i32
      %23 = tpu.memref_slice %arg3[%c0_i32_17, %c0_i32_19] : memref<16x32xf32, #tpu.memory_space<any>> -> memref<1x32xf32, #tpu.memory_space<any>>
      %24 = tpu.memref_squeeze %23 : memref<1x32xf32, #tpu.memory_space<any>> -> memref<32xf32, #tpu.memory_space<any>>
      %c0_i32_20 = arith.constant 0 : i32
      %25 = tpu.memref_slice %arg6[%22, %c0_i32_20] : memref<128x32xf32, #tpu.memory_space<vmem>> -> memref<1x32xf32, #tpu.memory_space<vmem>>
      %26 = tpu.memref_squeeze %25 : memref<1x32xf32, #tpu.memory_space<vmem>> -> memref<32xf32, #tpu.memory_space<vmem>>
      %27 = tpu.memref_slice %arg8[%c0_i32_18] : memref<2x!tpu.dma_semaphore, #tpu.memory_space<semaphore_mem>> -> memref<1x!tpu.dma_semaphore, #tpu.memory_space<semaphore_mem>>
      %28 = tpu.memref_squeeze %27 : memref<1x!tpu.dma_semaphore, #tpu.memory_space<semaphore_mem>> -> memref<!tpu.dma_semaphore, #tpu.memory_space<semaphore_mem>>
      tpu.wait_dma2 semaphore(%28 : memref<!tpu.dma_semaphore, #tpu.memory_space<semaphore_mem>>) src(%24 : memref<32xf32, #tpu.memory_space<any>>) dst(%26 : memref<32xf32, #tpu.memory_space<vmem>>)
      %c0_i32_21 = arith.constant 0 : i32
      %c1_i32_22 = arith.constant 1 : i32
      %c0_i32_23 = arith.constant 0 : i32
      %29 = tpu.memref_slice %arg4[%c0_i32_21, %c0_i32_23] : memref<24x32xf32, #tpu.memory_space<any>> -> memref<1x32xf32, #tpu.memory_space<any>>
      %30 = tpu.memref_squeeze %29 : memref<1x32xf32, #tpu.memory_space<any>> -> memref<32xf32, #tpu.memory_space<any>>
      %c0_i32_24 = arith.constant 0 : i32
      %31 = tpu.memref_slice %arg7[%22, %c0_i32_24] : memref<128x32xf32, #tpu.memory_space<vmem>> -> memref<1x32xf32, #tpu.memory_space<vmem>>
      %32 = tpu.memref_squeeze %31 : memref<1x32xf32, #tpu.memory_space<vmem>> -> memref<32xf32, #tpu.memory_space<vmem>>
      %33 = tpu.memref_slice %arg8[%c1_i32_22] : memref<2x!tpu.dma_semaphore, #tpu.memory_space<semaphore_mem>> -> memref<1x!tpu.dma_semaphore, #tpu.memory_space<semaphore_mem>>
      %34 = tpu.memref_squeeze %33 : memref<1x!tpu.dma_semaphore, #tpu.memory_space<semaphore_mem>> -> memref<!tpu.dma_semaphore, #tpu.memory_space<semaphore_mem>>
      tpu.wait_dma2 semaphore(%34 : memref<!tpu.dma_semaphore, #tpu.memory_space<semaphore_mem>>) src(%30 : memref<32xf32, #tpu.memory_space<any>>) dst(%32 : memref<32xf32, #tpu.memory_space<vmem>>)
    }
    %c128_i32_5 = arith.constant 128 : i32
    %c0 = arith.constant 0 : index
    %c0_6 = arith.constant 0 : index
    %3 = vector.load %arg6[%c0, %c0_6] : memref<128x32xf32, #tpu.memory_space<vmem>>, vector<128x32xf32>
    %c0_7 = arith.constant 0 : index
    %c0_8 = arith.constant 0 : index
    %4 = vector.load %arg7[%c0_7, %c0_8] : memref<128x32xf32, #tpu.memory_space<vmem>>, vector<128x32xf32>
    %5 = arith.mulf %3, %4 : vector<128x32xf32>
    %cst = arith.constant dense<0.000000e+00> : vector<128xf32>
    %6 = vector.multi_reduction <add>, %5, %cst [1] : vector<128x32xf32> to vector<128xf32>
    %7 = arith.mulf %3, %3 : vector<128x32xf32>
    %cst_9 = arith.constant dense<0.000000e+00> : vector<128xf32>
    %8 = vector.multi_reduction <add>, %7, %cst_9 [1] : vector<128x32xf32> to vector<128xf32>
    %9 = arith.mulf %4, %4 : vector<128x32xf32>
    %cst_10 = arith.constant dense<0.000000e+00> : vector<128xf32>
    %10 = vector.multi_reduction <add>, %9, %cst_10 [1] : vector<128x32xf32> to vector<128xf32>
    %cst_11 = arith.constant 9.99999993E-9 : f32
    %cst_12 = arith.constant 9.99999993E-9 : f32
    %11 = arith.mulf %cst_11, %cst_12 : f32
    %12 = vector.broadcast %11 : f32 to vector<128xf32>
    %13 = arith.maximumf %8, %12 : vector<128xf32>
    %14 = vector.broadcast %11 : f32 to vector<128xf32>
    %15 = arith.maximumf %10, %14 : vector<128xf32>
    %16 = arith.mulf %13, %15 : vector<128xf32>
    %17 = math.rsqrt %16 : vector<128xf32>
    %18 = arith.mulf %6, %17 : vector<128xf32>
    %19 = vector.shape_cast %18 : vector<128xf32> to vector<1x128xf32>
    %c0_13 = arith.constant 0 : index
    %c0_14 = arith.constant 0 : index
    %20 = vector.load %arg5[%c0_13, %c0_14] : memref<1x128xf32, #tpu.memory_space<vmem>>, vector<1x128xf32>
    tpu.vector_store %arg5[%c0_13, %c0_14], %19 {strides = array<i32>} : memref<1x128xf32, #tpu.memory_space<vmem>>, vector<1x128xf32>,
    return
  }
  func.func @transform_2(%arg0: i32, %arg1: memref<128xi32, #tpu.memory_space<smem>>, %arg2: memref<128xi32, #tpu.memory_space<smem>>) -> (i32, i32) {
    %c0_i32 = arith.constant 0 : i32
    %c0_i32_0 = arith.constant 0 : i32
    return %arg0, %c0_i32 : i32, i32
  }
}

</mosaic_0001>

<llo_original>
// kernel: tpu_custom_call.1
$region0: #{tpu_custom_call.1}
  #allocation0 [shape = 'u32[]', space=smem, size = 0x4, offset = 0x4, fixed_abs, tag = 'smem constant byte address 0x4 - core index']
  #allocation1 [shape = 'u32[144,128]{1,0:T(1,128)}', space=vmem, size = 0x12000, scoped, tag = 'internal scratch']
  #allocation2 [shape = 'f32[128,32]{1,0:T(8,128)}', space=vmem, size = 0x10000, scoped, tag = 'scratch operand']
  #allocation3 [shape = 'f32[128,32]{1,0:T(8,128)}', space=vmem, size = 0x10000, scoped, tag = 'scratch operand']
  #allocation4 [shape = 's32[2]{0}', space=sflag, size = 0x8, scoped, tag = 'scratch operand']
  #allocation5 [shape = 's32[1]{0}', space=sflag, size = 0x4, scoped, tag = 'scoped memory for tpu_custom_call.1']
  #allocation6 [shape = 'u8[512]{0}', space=smem, size = 0x200, scoped, tag = 'prefetched SMEM operand 0']
  #allocation7 [shape = 'u8[512]{0}', space=smem, size = 0x200, scoped, tag = 'prefetched SMEM operand 1']
  #allocation10 [shape = 's32[]', space=sflag, size = 0x4, offset = 0, fixed_abs, tag = 'sflag constant byte address 0x0 - dummy sync flag']
  #allocation11 [shape = 's32[]', space=sflag, size = 0x4, offset = 0, fixed_abs, tag = 'sflag constant byte address 0x0 - dummy sync flag']
  #allocation12 [shape = 'u32[]', space=smem, size = 0x4, offset = 0x44, fixed_abs, tag = 'smem constant byte address 0x44 - assertion arg 0']
  #allocation13 [shape = 'u32[]', space=smem, size = 0x4, offset = 0x48, fixed_abs, tag = 'smem constant byte address 0x48 - assertion arg 1']
  #allocation14 [shape = 's32[]', space=sflag, size = 0x4, offset = 0, fixed_abs, tag = 'sflag constant byte address 0x0 - dummy sync flag']
  #allocation15 [shape = 's32[]', space=sflag, size = 0x4, offset = 0, fixed_abs, tag = 'sflag constant byte address 0x0 - dummy sync flag']
  %s0 = inlined_call_operand.hbm [shape: s32[128], index: 0, kind: input, shape index: {}]
  %s1 = inlined_call_operand.vmem [shape: s32[128], index: 1, kind: input, shape index: {}]
  %s2 = inlined_call_operand.hbm [shape: f32[16,32], index: 2, kind: input, shape index: {}]
  %s3 = inlined_call_operand.hbm [shape: f32[24,32], index: 3, kind: input, shape index: {}]
  %s4 = inlined_call_operand.hbm [shape: f32[1,128], index: 4, kind: output, shape index: {}]
  %s5 = sld [smem:[#allocation0]]
  $region32: #{tpu_custom_call.1} parent=0
    _
  %s7 = ssub.s32 1, %s5
  %s8 = scalar_select 0, %s7, %s5
  %10 = dma.hbm_to_smem %s0, 16, [#allocation6], [#allocation5]
  %s11 = sshll.u32 %s1, 4
  %s12 = int_to_ptr.vmem [resolvable:$true] %s11
  %14 = dma.vmem_to_smem %s12, 16, [#allocation7], [#allocation5]
  %15 = dma.done [#allocation5], 32
  %16 = sfence
  $region1: #{tpu_custom_call.1} parent=0
    #allocation8 [shape = 'u8[512]{0}', space=vmem, size = 0x400, scoped, tag = 'output window, operand 0, single buffered']
    #allocation9 [shape = 's32[1]{0}', space=sflag, size = 0x4, scoped, tag = 'scoped memory for tpu_custom_call.1']
    %17 = vsyncpa [#allocation9], 0
    %s18 = smul.u32 0, 128
    loop: start=0, step=1, limit=128
    $region2: #{tpu_custom_call.1} parent=1 // loop_pre_header
      _
    $region3: #{tpu_custom_call.1} parent=1 // loop_header
      %s20 = sphi 0, %s24
      %p21 = scmp.ge.s32.totalorder %s20, 128
    $region4: #{tpu_custom_call.1} parent=1 // loop_header_branch
      %23 = sbr.rel (%p21) target = $region8
    $region5: #{tpu_custom_call.1} parent=1 // loop_body
      %s25 = sadd.s32 %s18, %s20
      %s26 = sld [smem:[#allocation6 + %s25]]
      %s27 = sld [smem:[#allocation7 + %s25]]
      %s28 = smul.addr %s26, 16
      %s29 = scalar_lea.hbm %s2, %s28
      %s30 = scalar_lea.vmem [#allocation2], %s20
      // Predicated region
      $region9: #{tpu_custom_call.1} parent=5 // pred_check
        _
      $region10: #{tpu_custom_call.1} parent=5 // pred_check_branch
        %32 = sbr.rel target = $region12
      $region11: #{tpu_custom_call.1} parent=5 // pred_region
        %33 = sst [smem:[#allocation12]] [#allocation11]
        %34 = sst [smem:[#allocation13]] [#allocation10]
      $region12: #{tpu_custom_call.1} parent=5 // pred_fallthru
        _
      %36 = shalt.err (0)
      %s38 = sshll.u32 %s30, 4
      %s39 = int_to_ptr.vmem [resolvable:$true] %s38
      %41 = dma.hbm_to_vmem [thread:$0]  %s29, 16, %s39, [#allocation4]
      %s42 = smul.addr %s27, 16
      %s43 = scalar_lea.hbm %s3, %s42
      %s44 = scalar_lea.vmem [#allocation3], %s20
      %s45 = scalar_lea.sflag [#allocation4], 1
      // Predicated region
      $region13: #{tpu_custom_call.1} parent=5 // pred_check
        _
      $region14: #{tpu_custom_call.1} parent=5 // pred_check_branch
        %47 = sbr.rel target = $region16
      $region15: #{tpu_custom_call.1} parent=5 // pred_region
        %48 = sst [smem:[#allocation12]] [#allocation15]
        %49 = sst [smem:[#allocation13]] [#allocation14]
      $region16: #{tpu_custom_call.1} parent=5 // pred_fallthru
        _
      %51 = shalt.err (0)
      %s53 = sshll.u32 %s44, 4
      %s54 = int_to_ptr.vmem [resolvable:$true] %s53
      %56 = dma.hbm_to_vmem [thread:$0]  %s43, 16, %s54, %s45
    $region6: #{tpu_custom_call.1} parent=1 // loop_footer
      %s24 = sadd.s32 1, %s20
    $region7: #{tpu_custom_call.1} parent=1 // loop_footer_branch
      %19 = sbr.rel target = $region3
    $region8: #{tpu_custom_call.1} parent=1 // loop_exit
      _
    loop: start=0, step=1, limit=128
    $region17: #{tpu_custom_call.1} parent=1 // loop_pre_header
      _
    $region18: #{tpu_custom_call.1} parent=1 // loop_header
      %s58 = sphi 0, %s62
      %p59 = scmp.ge.s32.totalorder %s58, 128
    $region19: #{tpu_custom_call.1} parent=1 // loop_header_branch
      %61 = sbr.rel (%p59) target = $region23
    $region20: #{tpu_custom_call.1} parent=1 // loop_body
      %64 = dma.done [#allocation4], 16
      %s65 = scalar_lea.sflag [#allocation4], 1
      %67 = dma.done %s65, 16
    $region21: #{tpu_custom_call.1} parent=1 // loop_footer
      %s62 = sadd.s32 1, %s58
    $region22: #{tpu_custom_call.1} parent=1 // loop_footer_branch
      %57 = sbr.rel target = $region18
    $region23: #{tpu_custom_call.1} parent=1 // loop_exit
      _
    %v68 = vld [vmem:[#allocation2] sm:$0xff]
    %v69 = vld [vmem:[#allocation2 + $0x8] sm:$0xff]
    %v70 = vld [vmem:[#allocation2 + $0x10] sm:$0xff]
    %v71 = vld [vmem:[#allocation2 + $0x18] sm:$0xff]
    %v72 = vld [vmem:[#allocation2 + $0x20] sm:$0xff]
    %v73 = vld [vmem:[#allocation2 + $0x28] sm:$0xff]
    %v74 = vld [vmem:[#allocation2 + $0x30] sm:$0xff]
    %v75 = vld [vmem:[#allocation2 + $0x38] sm:$0xff]
    %v76 = vld [vmem:[#allocation2 + $0x40] sm:$0xff]
    %v77 = vld [vmem:[#allocation2 + $0x48] sm:$0xff]
    %v78 = vld [vmem:[#allocation2 + $0x50] sm:$0xff]
    %v79 = vld [vmem:[#allocation2 + $0x58] sm:$0xff]
    %v80 = vld [vmem:[#allocation2 + $0x60] sm:$0xff]
    %v81 = vld [vmem:[#allocation2 + $0x68] sm:$0xff]
    %v82 = vld [vmem:[#allocation2 + $0x70] sm:$0xff]
    %v83 = vld [vmem:[#allocation2 + $0x78] sm:$0xff]
    %v84 = vld [vmem:[#allocation3] sm:$0xff]
    %v85 = vld [vmem:[#allocation3 + $0x8] sm:$0xff]
    %v86 = vld [vmem:[#allocation3 + $0x10] sm:$0xff]
    %v87 = vld [vmem:[#allocation3 + $0x18] sm:$0xff]
    %v88 = vld [vmem:[#allocation3 + $0x20] sm:$0xff]
    %v89 = vld [vmem:[#allocation3 + $0x28] sm:$0xff]
    %v90 = vld [vmem:[#allocation3 + $0x30] sm:$0xff]
    %v91 = vld [vmem:[#allocation3 + $0x38] sm:$0xff]
    %v92 = vld [vmem:[#allocation3 + $0x40] sm:$0xff]
    %v93 = vld [vmem:[#allocation3 + $0x48] sm:$0xff]
    %v94 = vld [vmem:[#allocation3 + $0x50] sm:$0xff]
    %v95 = vld [vmem:[#allocation3 + $0x58] sm:$0xff]
    %v96 = vld [vmem:[#allocation3 + $0x60] sm:$0xff]
    %v97 = vld [vmem:[#allocation3 + $0x68] sm:$0xff]
    %v98 = vld [vmem:[#allocation3 + $0x70] sm:$0xff]
    %v99 = vld [vmem:[#allocation3 + $0x78] sm:$0xff]
    %v100 = vmul.f32 %v68, %v84
    %v101 = vmul.f32 %v69, %v85
    %v102 = vmul.f32 %v70, %v86
    %v103 = vmul.f32 %v71, %v87
    %v104 = vmul.f32 %v72, %v88
    %v105 = vmul.f32 %v73, %v89
    %v106 = vmul.f32 %v74, %v90
    %v107 = vmul.f32 %v75, %v91
    %v108 = vmul.f32 %v76, %v92
    %v109 = vmul.f32 %v77, %v93
    %v110 = vmul.f32 %v78, %v94
    %v111 = vmul.f32 %v79, %v95
    %v112 = vmul.f32 %v80, %v96
    %v113 = vmul.f32 %v81, %v97
    %v114 = vmul.f32 %v82, %v98
    %v115 = vmul.f32 %v83, %v99
    %vm116 = vcmask 261120
    %v117 = vsel %vm116, %v100, 0.0
    %118 = vadd.xlane.f32.xlu0 %v117
    %v119 = vpop.xlane.xlu0 %118
    %v120 = vsel %vm116, %v101, 0.0
    %121 = vadd.xlane.f32.xlu0 %v120
    %v122 = vpop.xlane.xlu0 %121
    %v123 = vsel %vm116, %v102, 0.0
    %124 = vadd.xlane.f32.xlu0 %v123
    %v125 = vpop.xlane.xlu0 %124
    %v126 = vsel %vm116, %v103, 0.0
    %127 = vadd.xlane.f32.xlu0 %v126
    %v128 = vpop.xlane.xlu0 %127
    %v129 = vsel %vm116, %v104, 0.0
    %130 = vadd.xlane.f32.xlu0 %v129
    %v131 = vpop.xlane.xlu0 %130
    %v132 = vsel %vm116, %v105, 0.0
    %133 = vadd.xlane.f32.xlu0 %v132
    %v134 = vpop.xlane.xlu0 %133
    %v135 = vsel %vm116, %v106, 0.0
    %136 = vadd.xlane.f32.xlu0 %v135
    %v137 = vpop.xlane.xlu0 %136
    %v138 = vsel %vm116, %v107, 0.0
    %139 = vadd.xlane.f32.xlu0 %v138
    %v140 = vpop.xlane.xlu0 %139
    %v141 = vsel %vm116, %v108, 0.0
    %142 = vadd.xlane.f32.xlu0 %v141
    %v143 = vpop.xlane.xlu0 %142
    %v144 = vsel %vm116, %v109, 0.0
    %145 = vadd.xlane.f32.xlu0 %v144
    %v146 = vpop.xlane.xlu0 %145
    %v147 = vsel %vm116, %v110, 0.0
    %148 = vadd.xlane.f32.xlu0 %v147
    %v149 = vpop.xlane.xlu0 %148
    %v150 = vsel %vm116, %v111, 0.0
    %151 = vadd.xlane.f32.xlu0 %v150
    %v152 = vpop.xlane.xlu0 %151
    %v153 = vsel %vm116, %v112, 0.0
    %154 = vadd.xlane.f32.xlu0 %v153
    %v155 = vpop.xlane.xlu0 %154
    %v156 = vsel %vm116, %v113, 0.0
    %157 = vadd.xlane.f32.xlu0 %v156
    %v158 = vpop.xlane.xlu0 %157
    %v159 = vsel %vm116, %v114, 0.0
    %160 = vadd.xlane.f32.xlu0 %v159
    %v161 = vpop.xlane.xlu0 %160
    %v162 = vsel %vm116, %v115, 0.0
    %163 = vadd.xlane.f32.xlu0 %v162
    %v164 = vpop.xlane.xlu0 %163
    %v165 = vmul.f32 %v68, %v68
    %v166 = vmul.f32 %v69, %v69
    %v167 = vmul.f32 %v70, %v70
    %v168 = vmul.f32 %v71, %v71
    %v169 = vmul.f32 %v72, %v72
    %v170 = vmul.f32 %v73, %v73
    %v171 = vmul.f32 %v74, %v74
    %v172 = vmul.f32 %v75, %v75
    %v173 = vmul.f32 %v76, %v76
    %v174 = vmul.f32 %v77, %v77
    %v175 = vmul.f32 %v78, %v78
    %v176 = vmul.f32 %v79, %v79
    %v177 = vmul.f32 %v80, %v80
    %v178 = vmul.f32 %v81, %v81
    %v179 = vmul.f32 %v82, %v82
    %v180 = vmul.f32 %v83, %v83
    %v181 = vsel %vm116, %v165, 0.0
    %182 = vadd.xlane.f32.xlu0 %v181
    %v183 = vpop.xlane.xlu0 %182
    %v184 = vsel %vm116, %v166, 0.0
    %185 = vadd.xlane.f32.xlu0 %v184
    %v186 = vpop.xlane.xlu0 %185
    %v187 = vsel %vm116, %v167, 0.0
    %188 = vadd.xlane.f32.xlu0 %v187
    %v189 = vpop.xlane.xlu0 %188
    %v190 = vsel %vm116, %v168, 0.0
    %191 = vadd.xlane.f32.xlu0 %v190
    %v192 = vpop.xlane.xlu0 %191
    %v193 = vsel %vm116, %v169, 0.0
    %194 = vadd.xlane.f32.xlu0 %v193
    %v195 = vpop.xlane.xlu0 %194
    %v196 = vsel %vm116, %v170, 0.0
    %197 = vadd.xlane.f32.xlu0 %v196
    %v198 = vpop.xlane.xlu0 %197
    %v199 = vsel %vm116, %v171, 0.0
    %200 = vadd.xlane.f32.xlu0 %v199
    %v201 = vpop.xlane.xlu0 %200
    %v202 = vsel %vm116, %v172, 0.0
    %203 = vadd.xlane.f32.xlu0 %v202
    %v204 = vpop.xlane.xlu0 %203
    %v205 = vsel %vm116, %v173, 0.0
    %206 = vadd.xlane.f32.xlu0 %v205
    %v207 = vpop.xlane.xlu0 %206
    %v208 = vsel %vm116, %v174, 0.0
    %209 = vadd.xlane.f32.xlu0 %v208
    %v210 = vpop.xlane.xlu0 %209
    %v211 = vsel %vm116, %v175, 0.0
    %212 = vadd.xlane.f32.xlu0 %v211
    %v213 = vpop.xlane.xlu0 %212
    %v214 = vsel %vm116, %v176, 0.0
    %215 = vadd.xlane.f32.xlu0 %v214
    %v216 = vpop.xlane.xlu0 %215
    %v217 = vsel %vm116, %v177, 0.0
    %218 = vadd.xlane.f32.xlu0 %v217
    %v219 = vpop.xlane.xlu0 %218
    %v220 = vsel %vm116, %v178, 0.0
    %221 = vadd.xlane.f32.xlu0 %v220
    %v222 = vpop.xlane.xlu0 %221
    %v223 = vsel %vm116, %v179, 0.0
    %224 = vadd.xlane.f32.xlu0 %v223
    %v225 = vpop.xlane.xlu0 %224
    %v226 = vsel %vm116, %v180, 0.0
    %227 = vadd.xlane.f32.xlu0 %v226
    %v228 = vpop.xlane.xlu0 %227
    %v229 = vmul.f32 %v84, %v84
    %v230 = vmul.f32 %v85, %v85
    %v231 = vmul.f32 %v86, %v86
    %v232 = vmul.f32 %v87, %v87
    %v233 = vmul.f32 %v88, %v88
    %v234 = vmul.f32 %v89, %v89
    %v235 = vmul.f32 %v90, %v90
    %v236 = vmul.f32 %v91, %v91
    %v237 = vmul.f32 %v92, %v92
    %v238 = vmul.f32 %v93, %v93
    %v239 = vmul.f32 %v94, %v94
    %v240 = vmul.f32 %v95, %v95
    %v241 = vmul.f32 %v96, %v96
    %v242 = vmul.f32 %v97, %v97
    %v243 = vmul.f32 %v98, %v98
    %v244 = vmul.f32 %v99, %v99
    %v245 = vsel %vm116, %v229, 0.0
    %246 = vadd.xlane.f32.xlu0 %v245
    %v247 = vpop.xlane.xlu0 %246
    %v248 = vsel %vm116, %v230, 0.0
    %249 = vadd.xlane.f32.xlu0 %v248
    %v250 = vpop.xlane.xlu0 %249
    %v251 = vsel %vm116, %v231, 0.0
    %252 = vadd.xlane.f32.xlu0 %v251
    %v253 = vpop.xlane.xlu0 %252
    %v254 = vsel %vm116, %v232, 0.0
    %255 = vadd.xlane.f32.xlu0 %v254
    %v256 = vpop.xlane.xlu0 %255
    %v257 = vsel %vm116, %v233, 0.0
    %258 = vadd.xlane.f32.xlu0 %v257
    %v259 = vpop.xlane.xlu0 %258
    %v260 = vsel %vm116, %v234, 0.0
    %261 = vadd.xlane.f32.xlu0 %v260
    %v262 = vpop.xlane.xlu0 %261
    %v263 = vsel %vm116, %v235, 0.0
    %264 = vadd.xlane.f32.xlu0 %v263
    %v265 = vpop.xlane.xlu0 %264
    %v266 = vsel %vm116, %v236, 0.0
    %267 = vadd.xlane.f32.xlu0 %v266
    %v268 = vpop.xlane.xlu0 %267
    %v269 = vsel %vm116, %v237, 0.0
    %270 = vadd.xlane.f32.xlu0 %v269
    %v271 = vpop.xlane.xlu0 %270
    %v272 = vsel %vm116, %v238, 0.0
    %273 = vadd.xlane.f32.xlu0 %v272
    %v274 = vpop.xlane.xlu0 %273
    %v275 = vsel %vm116, %v239, 0.0
    %276 = vadd.xlane.f32.xlu0 %v275
    %v277 = vpop.xlane.xlu0 %276
    %v278 = vsel %vm116, %v240, 0.0
    %279 = vadd.xlane.f32.xlu0 %v278
    %v280 = vpop.xlane.xlu0 %279
    %v281 = vsel %vm116, %v241, 0.0
    %282 = vadd.xlane.f32.xlu0 %v281
    %v283 = vpop.xlane.xlu0 %282
    %v284 = vsel %vm116, %v242, 0.0
    %285 = vadd.xlane.f32.xlu0 %v284
    %v286 = vpop.xlane.xlu0 %285
    %v287 = vsel %vm116, %v243, 0.0
    %288 = vadd.xlane.f32.xlu0 %v287
    %v289 = vpop.xlane.xlu0 %288
    %v290 = vsel %vm116, %v244, 0.0
    %291 = vadd.xlane.f32.xlu0 %v290
    %v292 = vpop.xlane.xlu0 %291
    %v293 = vmax.f32 %v183, 1e-16
    %v294 = vmax.f32 %v186, 1e-16
    %v295 = vmax.f32 %v189, 1e-16
    %v296 = vmax.f32 %v192, 1e-16
    %v297 = vmax.f32 %v195, 1e-16
    %v298 = vmax.f32 %v198, 1e-16
    %v299 = vmax.f32 %v201, 1e-16
    %v300 = vmax.f32 %v204, 1e-16
    %v301 = vmax.f32 %v207, 1e-16
    %v302 = vmax.f32 %v210, 1e-16
    %v303 = vmax.f32 %v213, 1e-16
    %v304 = vmax.f32 %v216, 1e-16
    %v305 = vmax.f32 %v219, 1e-16
    %v306 = vmax.f32 %v222, 1e-16
    %v307 = vmax.f32 %v225, 1e-16
    %v308 = vmax.f32 %v228, 1e-16
    %v309 = vmax.f32 %v247, 1e-16
    %v310 = vmax.f32 %v250, 1e-16
    %v311 = vmax.f32 %v253, 1e-16
    %v312 = vmax.f32 %v256, 1e-16
    %v313 = vmax.f32 %v259, 1e-16
    %v314 = vmax.f32 %v262, 1e-16
    %v315 = vmax.f32 %v265, 1e-16
    %v316 = vmax.f32 %v268, 1e-16
    %v317 = vmax.f32 %v271, 1e-16
    %v318 = vmax.f32 %v274, 1e-16
    %v319 = vmax.f32 %v277, 1e-16
    %v320 = vmax.f32 %v280, 1e-16
    %v321 = vmax.f32 %v283, 1e-16
    %v322 = vmax.f32 %v286, 1e-16
    %v323 = vmax.f32 %v289, 1e-16
    %v324 = vmax.f32 %v292, 1e-16
    %v325 = vmul.f32 %v293, %v309
    %v326 = vmul.f32 %v294, %v310
    %v327 = vmul.f32 %v295, %v311
    %v328 = vmul.f32 %v296, %v312
    %v329 = vmul.f32 %v297, %v313
    %v330 = vmul.f32 %v298, %v314
    %v331 = vmul.f32 %v299, %v315
    %v332 = vmul.f32 %v300, %v316
    %v333 = vmul.f32 %v301, %v317
    %v334 = vmul.f32 %v302, %v318
    %v335 = vmul.f32 %v303, %v319
    %v336 = vmul.f32 %v304, %v320
    %v337 = vmul.f32 %v305, %v321
    %v338 = vmul.f32 %v306, %v322
    %v339 = vmul.f32 %v307, %v323
    %v340 = vmul.f32 %v308, %v324
    %v341 = vrsqrt.pop %v325
    %v342 = vrsqrt.pop %v326
    %v343 = vrsqrt.pop %v327
    %v344 = vrsqrt.pop %v328
    %v345 = vrsqrt.pop %v329
    %v346 = vrsqrt.pop %v330
    %v347 = vrsqrt.pop %v331
    %v348 = vrsqrt.pop %v332
    %v349 = vrsqrt.pop %v333
    %v350 = vrsqrt.pop %v334
    %v351 = vrsqrt.pop %v335
    %v352 = vrsqrt.pop %v336
    %v353 = vrsqrt.pop %v337
    %v354 = vrsqrt.pop %v338
    %v355 = vrsqrt.pop %v339
    %v356 = vrsqrt.pop %v340
    %v357 = vmul.f32 %v119, %v341
    %v358 = vmul.f32 %v122, %v342
    %v359 = vmul.f32 %v125, %v343
    %v360 = vmul.f32 %v128, %v344
    %v361 = vmul.f32 %v131, %v345
    %v362 = vmul.f32 %v134, %v346
    %v363 = vmul.f32 %v137, %v347
    %v364 = vmul.f32 %v140, %v348
    %v365 = vmul.f32 %v143, %v349
    %v366 = vmul.f32 %v146, %v350
    %v367 = vmul.f32 %v149, %v351
    %v368 = vmul.f32 %v152, %v352
    %v369 = vmul.f32 %v155, %v353
    %v370 = vmul.f32 %v158, %v354
    %v371 = vmul.f32 %v161, %v355
    %v372 = vmul.f32 %v164, %v356
    %v389 = vlaneseq
    %v390 = vand.u32 %v389, 127
    %v391 = vlaneseq
    %v392 = vshrl.u32 %v391, 7
    %v393 = vsub.s32 %v390, %v392
    %v394 = vrot.slane %v357, %v393
    %v395 = vadd.s32 %v390, 4294967288
    %v396 = vlaneseq
    %v397 = vshrl.u32 %v396, 7
    %v398 = vsub.s32 %v395, %v397
    %v399 = vrot.slane %v358, %v398
    %vm400 = vcmask 130112
    %v401 = vsel %vm400, %v399, %v394
    %v402 = vadd.s32 %v390, 4294967280
    %v403 = vlaneseq
    %v404 = vshrl.u32 %v403, 7
    %v405 = vsub.s32 %v402, %v404
    %v406 = vrot.slane %v359, %v405
    %vm407 = vcmask 195712
    %v408 = vsel %vm407, %v406, %v401
    %v409 = vadd.s32 %v390, 4294967272
    %v410 = vlaneseq
    %v411 = vshrl.u32 %v410, 7
    %v412 = vsub.s32 %v409, %v411
    %v413 = vrot.slane %v360, %v412
    %vm414 = vcmask 261312
    %v415 = vsel %vm414, %v413, %v408
    %v416 = vadd.s32 %v390, 4294967264
    %v417 = vlaneseq
    %v418 = vshrl.u32 %v417, 7
    %v419 = vsub.s32 %v416, %v418
    %v420 = vrot.slane %v361, %v419
    %vm421 = vcmask 326912
    %v422 = vsel %vm421, %v420, %v415
    %v423 = vadd.s32 %v390, 4294967256
    %v424 = vlaneseq
    %v425 = vshrl.u32 %v424, 7
    %v426 = vsub.s32 %v423, %v425
    %v427 = vrot.slane %v362, %v426
    %vm428 = vcmask 392512
    %v429 = vsel %vm428, %v427, %v422
    %v430 = vadd.s32 %v390, 4294967248
    %v431 = vlaneseq
    %v432 = vshrl.u32 %v431, 7
    %v433 = vsub.s32 %v430, %v432
    %v434 = vrot.slane %v363, %v433
    %vm435 = vcmask 458112
    %v436 = vsel %vm435, %v434, %v429
    %v437 = vadd.s32 %v390, 4294967240
    %v438 = vlaneseq
    %v439 = vshrl.u32 %v438, 7
    %v440 = vsub.s32 %v437, %v439
    %v441 = vrot.slane %v364, %v440
    %vm442 = vcmask 523712
    %v443 = vsel %vm442, %v441, %v436
    %v444 = vadd.s32 %v390, 4294967232
    %v445 = vlaneseq
    %v446 = vshrl.u32 %v445, 7
    %v447 = vsub.s32 %v444, %v446
    %v448 = vrot.slane %v365, %v447
    %vm449 = vcmask 589312
    %v450 = vsel %vm449, %v448, %v443
    %v451 = vadd.s32 %v390, 4294967224
    %v452 = vlaneseq
    %v453 = vshrl.u32 %v452, 7
    %v454 = vsub.s32 %v451, %v453
    %v455 = vrot.slane %v366, %v454
    %vm456 = vcmask 654912
    %v457 = vsel %vm456, %v455, %v450
    %v458 = vadd.s32 %v390, 4294967216
    %v459 = vlaneseq
    %v460 = vshrl.u32 %v459, 7
    %v461 = vsub.s32 %v458, %v460
    %v462 = vrot.slane %v367, %v461
    %vm463 = vcmask 720512
    %v464 = vsel %vm463, %v462, %v457
    %v465 = vadd.s32 %v390, 4294967208
    %v466 = vlaneseq
    %v467 = vshrl.u32 %v466, 7
    %v468 = vsub.s32 %v465, %v467
    %v469 = vrot.slane %v368, %v468
    %vm470 = vcmask 786112
    %v471 = vsel %vm470, %v469, %v464
    %v472 = vadd.s32 %v390, 4294967200
    %v473 = vlaneseq
    %v474 = vshrl.u32 %v473, 7
    %v475 = vsub.s32 %v472, %v474
    %v476 = vrot.slane %v369, %v475
    %vm477 = vcmask 851712
    %v478 = vsel %vm477, %v476, %v471
    %v479 = vadd.s32 %v390, 4294967192
    %v480 = vlaneseq
    %v481 = vshrl.u32 %v480, 7
    %v482 = vsub.s32 %v479, %v481
    %v483 = vrot.slane %v370, %v482
    %vm484 = vcmask 917312
    %v485 = vsel %vm484, %v483, %v478
    %v486 = vadd.s32 %v390, 4294967184
    %v487 = vlaneseq
    %v488 = vshrl.u32 %v487, 7
    %v489 = vsub.s32 %v486, %v488
    %v490 = vrot.slane %v371, %v489
    %vm491 = vcmask 982912
    %v492 = vsel %vm491, %v490, %v485
    %v493 = vadd.s32 %v390, 4294967176
    %v494 = vlaneseq
    %v495 = vshrl.u32 %v494, 7
    %v496 = vsub.s32 %v493, %v495
    %v497 = vrot.slane %v372, %v496
    %vm498 = vcmask 1048512
    %v499 = vsel %vm498, %v497, %v492
    %501 = vst [vmem:[#allocation8] sm:$0x1] %v499
    // Predicated region
    $region24: #{tpu_custom_call.1} parent=1 // pred_check
      _
    $region25: #{tpu_custom_call.1} parent=1 // pred_check_branch
      %503 = sbr.rel (0) target = $region27
    $region26: #{tpu_custom_call.1} parent=1 // pred_region
      %s505 = ssub.s32 16, 16
      %506 = vsyncadd [#allocation9], %s505
      %s508 = sshll.u32 [#allocation8], 4
      %s509 = int_to_ptr.vmem [resolvable:$true] %s508
      %511 = dma.vmem_to_hbm [thread:$0]  %s509, 16, %s4, [#allocation9]
    $region27: #{tpu_custom_call.1} parent=1 // pred_fallthru
      _
    // Predicated region
    $region28: #{tpu_custom_call.1} parent=1 // pred_check
      _
    $region29: #{tpu_custom_call.1} parent=1 // pred_check_branch
      %513 = sbr.rel (0) target = $region31
    $region30: #{tpu_custom_call.1} parent=1 // pred_region
      %514 = dma.done [#allocation9], 16
    $region31: #{tpu_custom_call.1} parent=1 // pred_fallthru
      _
    %515 = vsyncpa [#allocation9], 1
  %516 = vsyncmov [#allocation4]
  %s517 = vpop.sfrf %516
  %p518 = scmp.eq.s32.totalorder %s517, 0
  %p519 = pneg %p518
  %521 = shalt.err (%p519)
  %s522 = scalar_lea.sflag [#allocation4], 1
  %523 = vsyncmov %s522
  %s524 = vpop.sfrf %523
  %p525 = scmp.eq.s32.totalorder %s524, 0
  %p526 = pneg %p525
  %528 = shalt.err (%p526)

</llo_original>
